<compile_context>
chip_gen: v7x
topology: tpu7x:2x2x1
jax: 0.10.0
libtpu: 0.0.40
codegen_flags: <defaults>
</compile_context>

<pallas_src>
import functools

import jax
import jax.numpy as jnp
import numpy as np
from jax import lax
from jax.experimental import pallas as pl
from jax.experimental.pallas import tpu as pltpu

LN_EPS = 1e-5  # PyTorch nn.LayerNorm default


def _round_up(a, b):
    return (a + b - 1) // b * b


def _vmem_capacity_bytes():
    try:
        cap = getattr(pltpu.get_tpu_info(), "vmem_capacity_bytes", None)
        if cap:
            return int(cap)
    except Exception:
        pass
    return 64 * 1024 * 1024  # conservative fallback (v7x per-TensorCore)


def _pick_tiles(rows, Dp, Hp, x_itemsize, budget, tm_max):
    """Largest (TM, TH) row/hidden tiles that fit the VMEM budget."""
    # Hidden tile: largest 128-multiple divisor of Hp among these candidates.
    th = 128
    for cand in (1024, 512, 256):
        if Hp % cand == 0:
            th = cand
            break
    th = min(th, Hp)

    # Row tile: multiple of 8; capped so the "parallel" row axis has >= ~8 grid
    # steps (keeps both v7x TensorCores fed), never below one 8-sublane tile.
    tm = max(8, min(tm_max, _round_up(pl.cdiv(rows, 8), 8)))

    def need(tm_, th_):
        return (2 * tm_ * Dp * x_itemsize    # x tile (double buffered)
                + 2 * tm_ * Dp * x_itemsize  # out tile
                + 2 * Dp * th_ * 2           # W1 tile (bf16)
                + 2 * th_ * 4                # b1 tile
                + 2 * th_ * Dp * 2           # W2 tile (bf16)
                + 2 * 8 * Dp * 4             # packed per-channel params
                + tm_ * Dp * 2               # xn scratch (bf16)
                + tm_ * 128 * 4              # gate scratch (lane padded)
                + tm_ * Dp * 4               # f32 y-accumulator scratch
                + tm_ * th_ * 6)             # relu(h) f32 + bf16 temporaries

    while th > 128 and Hp % (th // 2) == 0 and need(tm, th) > budget:
        th //= 2
    while tm > 8 and need(tm, th) > budget:
        tm -= 8
    return tm, th


def _rgffn_kernel(x_ref, w1_ref, b1_ref, w2_ref, pp_ref, out_ref,
                  xn_ref, gate_ref, acc_ref, *, d_real):
    # Grid: (row tiles ["parallel"], hidden tiles ["arbitrary"]).
    # x_ref  : (TM, Dp) token tile (caller dtype)
    # w1_ref : (Dp, TH) fc1 weight tile (bf16)
    # b1_ref : (1,  TH) fc1 bias tile   (f32)
    # w2_ref : (TH, Dp) fc2 weight tile (bf16)
    # pp_ref : (8,  Dp) packed params: [gamma, beta, gate_w, fc2_bias, gate_bias*1, 0,0,0]
    # scratch: xn (bf16), gate (f32), y-accumulator (f32) -- persist across k.
    k = pl.program_id(1)

    @pl.when(k == 0)
    def _():
        x = x_ref[...].astype(jnp.float32)
        gamma = pp_ref[0:1, :]
        beta = pp_ref[1:2, :]
        wg = pp_ref[2:3, :]
        bg = pp_ref[4:5, 0:1]
        # Fused LayerNorm statistics: one pass over x (padded channels are 0).
        inv_d = 1.0 / d_real
        s1 = jnp.sum(x, axis=-1, keepdims=True)
        s2 = jnp.sum(x * x, axis=-1, keepdims=True)
        mean = s1 * inv_d
        var = jnp.maximum(s2 * inv_d - mean * mean, 0.0)
        xn = (x - mean) * lax.rsqrt(var + LN_EPS) * gamma + beta
        xn_ref[...] = xn.astype(xn_ref.dtype)  # bf16 MXU operand
        # gate = sigmoid(xn . wg + bg): VPU multiply + XLU lane reduce
        # (keep the degenerate N=1 projection off the MXU).
        gate_ref[...] = jax.nn.sigmoid(
            jnp.sum(xn * wg, axis=-1, keepdims=True) + bg)
        acc_ref[...] = jnp.zeros_like(acc_ref)

    # Partial FFN for this hidden tile: acc += relu(xn @ W1_k + b1_k) @ W2_k
    # (bf16 operands, f32 accumulation on the MXU).
    h = jnp.dot(xn_ref[...], w1_ref[...],
                preferred_element_type=jnp.float32) + b1_ref[...]
    h = jnp.maximum(h, 0.0).astype(jnp.bfloat16)
    # TODO(synk): dropout omitted (eval-mode identity).
    acc_ref[...] += jnp.dot(h, w2_ref[...], preferred_element_type=jnp.float32)

    @pl.when(k == pl.num_programs(1) - 1)
    def _():
        b2 = pp_ref[3:4, :]
        x = x_ref[...].astype(jnp.float32)
        y = acc_ref[...] + b2
        out_ref[...] = (x + gate_ref[...] * y).astype(out_ref.dtype)


def residual_gated_ffn(x, params, *, tm_max=1024):
    """x: (..., D) float. Returns same shape and dtype. Eval-mode forward."""
    orig_shape = x.shape
    orig_dtype = x.dtype
    D = x.shape[-1]
    H = params['w1'].shape[1]
    Dp = _round_up(D, 128)  # lane-dense channel dim
    Hp = _round_up(H, 128)  # lane-dense hidden dim

    x2 = x.reshape(-1, D)
    rows = x2.shape[0]

    # --- budget-driven tile selection ---
    vmem_cap = _vmem_capacity_bytes()
    vmem_limit = max(32 * 1024 * 1024,
                     min(vmem_cap - 4 * 1024 * 1024, 112 * 1024 * 1024))
    x_itemsize = jnp.dtype(orig_dtype).itemsize
    TM, TH = _pick_tiles(rows, Dp, Hp, x_itemsize,
                         budget=int(vmem_limit * 0.85), tm_max=tm_max)

    rows_p = _round_up(rows, TM)
    x2p = jnp.pad(x2, ((0, rows_p - rows), (0, Dp - D)))

    # Weights shipped as bf16 (native MXU dtype, half the DMA/VMEM footprint);
    # zero padding keeps padded channels / hidden units inert.
    w1 = jnp.pad(params['w1'].astype(jnp.bfloat16), ((0, Dp - D), (0, Hp - H)))
    w2 = jnp.pad(params['w2'].astype(jnp.bfloat16), ((0, Hp - H), (0, Dp - D)))
    b1 = jnp.pad(params['b1'].astype(jnp.float32), ((0, Hp - H),))[None, :]

    # One lane-dense packed-parameter slab (8 sublanes x Dp lanes) -> single DMA.
    zrow = jnp.zeros((D,), jnp.float32)
    pp = jnp.stack([
        params['gamma'].astype(jnp.float32),
        params['beta'].astype(jnp.float32),
        params['wg'].astype(jnp.float32),
        params['b2'].astype(jnp.float32),
        jnp.broadcast_to(params['bg'].astype(jnp.float32), (D,)),
        zrow, zrow, zrow,
    ], axis=0)
    pp = jnp.pad(pp, ((0, 0), (0, Dp - D)))

    grid = (rows_p // TM, Hp // TH)
    kernel = functools.partial(_rgffn_kernel, d_real=float(D))

    out = pl.pallas_call(
        kernel,
        out_shape=jax.ShapeDtypeStruct((rows_p, Dp), orig_dtype),
        grid=grid,
        in_specs=[
            pl.BlockSpec((TM, Dp), lambda i, k: (i, 0)),  # token tile (constant over k)
            pl.BlockSpec((Dp, TH), lambda i, k: (0, k)),  # W1 hidden tile
            pl.BlockSpec((1, TH), lambda i, k: (0, k)),   # b1 hidden tile
            pl.BlockSpec((TH, Dp), lambda i, k: (k, 0)),  # W2 hidden tile
            pl.BlockSpec((8, Dp), lambda i, k: (0, 0)),   # packed per-channel params
        ],
        out_specs=pl.BlockSpec((TM, Dp), lambda i, k: (i, 0)),
        scratch_shapes=[
            pltpu.VMEM((TM, Dp), jnp.bfloat16),  # xn (normalized tokens, bf16)
            pltpu.VMEM((TM, 1), jnp.float32),    # gate
            pltpu.VMEM((TM, Dp), jnp.float32),   # y accumulator
        ],
        compiler_params=pltpu.CompilerParams(
            dimension_semantics=("parallel", "arbitrary"),
            vmem_limit_bytes=vmem_limit,
        ),
    )(x2p, w1, b1, w2, pp)

    return out[:rows, :D].reshape(orig_shape)


def reference(x, params):
    """Pure-JAX reference of the PyTorch forward (eval mode, f32 matmuls)."""
    mean = jnp.mean(x, axis=-1, keepdims=True)
    var = jnp.mean((x - mean) ** 2, axis=-1, keepdims=True)
    xn = (x - mean) / jnp.sqrt(var + LN_EPS) * params['gamma'] + params['beta']

    gate_logit = jnp.einsum('...d,d->...', xn, params['wg'])[..., None] + params['bg']
    gate = jax.nn.sigmoid(gate_logit)

    h = jax.nn.relu(
        jnp.dot(xn, params['w1'], precision=lax.Precision.HIGHEST) + params['b1'])
    y = jnp.dot(h, params['w2'], precision=lax.Precision.HIGHEST) + params['b2']
    return x + gate * y


def make_params(key, D, H):
    ks = jax.random.split(key, 8)
    s1 = 1.0 / np.sqrt(D)
    s2 = 1.0 / np.sqrt(H)
    return {
        'w1': jax.random.uniform(ks[0], (D, H), jnp.float32, -s1, s1),
        'b1': jax.random.uniform(ks[1], (H,), jnp.float32, -s1, s1),
        'w2': jax.random.uniform(ks[2], (H, D), jnp.float32, -s2, s2),
        'b2': jax.random.uniform(ks[3], (D,), jnp.float32, -s2, s2),
        'wg': jax.random.uniform(ks[4], (D,), jnp.float32, -s1, s1),
        'bg': jax.random.uniform(ks[5], (1,), jnp.float32, -s1, s1),
        'gamma': 1.0 + 0.1 * jax.random.normal(ks[6], (D,), jnp.float32),
        'beta': 0.1 * jax.random.normal(ks[7], (D,), jnp.float32),
    }


if __name__ == "__main__":
    B, S, D, H = 2, 8, 32, 64
    key = jax.random.PRNGKey(0)
    k_x, k_p = jax.random.split(key)

    x = jax.random.normal(k_x, (B, S, D), jnp.float32)
    params = make_params(k_p, D, H)

    out = jax.block_until_ready(residual_gated_ffn(x, params))
    ref = jax.block_until_ready(reference(x, params))

    assert out.shape == (B, S, D), out.shape
    assert out.dtype == x.dtype, out.dtype
    np.testing.assert_allclose(np.asarray(out), np.asarray(ref),
                               rtol=2e-2, atol=2e-2)
    print("KERNEL_OK")
</pallas_src>

<mosaic_0001>
module attributes {stable_mosaic.version = 11 : i64} {
  func.func @_rgffn_kernel(%arg0: i32, %arg1: i32, %arg2: memref<8x128xf32, #tpu.memory_space<vmem>>, %arg3: memref<128x128xbf16, #tpu.memory_space<vmem>>, %arg4: memref<1x128xf32, #tpu.memory_space<vmem>>, %arg5: memref<128x128xbf16, #tpu.memory_space<vmem>>, %arg6: memref<8x128xf32, #tpu.memory_space<vmem>>, %arg7: memref<8x128xf32, #tpu.memory_space<vmem>>, %arg8: memref<8x128xbf16, #tpu.memory_space<vmem>>, %arg9: memref<8x1xf32, #tpu.memory_space<vmem>>, %arg10: memref<8x128xf32, #tpu.memory_space<vmem>>) attributes {dimension_semantics = [#tpu.dimension_semantics<parallel>, #tpu.dimension_semantics<arbitrary>], iteration_bounds = array<i64: 2, 1>, scalar_prefetch = 0 : i64, scratch_operands = 3 : i64, tpu.core_type = #tpu.core_type<tc>, window_params = [{transform_indices = @transform_0, window_bounds = array<i64: 8, 128>}, {transform_indices = @transform_1, window_bounds = array<i64: 128, 128>}, {transform_indices = @transform_2, window_bounds = array<i64: 1, 128>}, {transform_indices = @transform_3, window_bounds = array<i64: 128, 128>}, {pipeline_mode = #tpu.pipeline_mode<synchronous>, transform_indices = @transform_4, window_bounds = array<i64: 8, 128>}, {transform_indices = @transform_5, window_bounds = array<i64: 8, 128>}]} {
    %c0_i32 = arith.constant 0 : i32
    %0 = arith.cmpi eq, %arg1, %c0_i32 : i32
    %1 = arith.extui %0 : i1 to i32
    %c0_i32_0 = arith.constant 0 : i32
    %2 = arith.cmpi ne, %1, %c0_i32_0 : i32
    scf.if %2 {
      %c0_16 = arith.constant 0 : index
      %c0_17 = arith.constant 0 : index
      %20 = vector.load %arg2[%c0_16, %c0_17] : memref<8x128xf32, #tpu.memory_space<vmem>>, vector<8x128xf32>
      %c0_18 = arith.constant 0 : index
      %c0_19 = arith.constant 0 : index
      %21 = vector.load %arg6[%c0_18, %c0_19] : memref<8x128xf32, #tpu.memory_space<vmem>>, vector<1x128xf32>
      %c1 = arith.constant 1 : index
      %c0_20 = arith.constant 0 : index
      %22 = vector.load %arg6[%c1, %c0_20] : memref<8x128xf32, #tpu.memory_space<vmem>>, vector<1x128xf32>
      %c2 = arith.constant 2 : index
      %c0_21 = arith.constant 0 : index
      %23 = vector.load %arg6[%c2, %c0_21] : memref<8x128xf32, #tpu.memory_space<vmem>>, vector<1x128xf32>
      %c4 = arith.constant 4 : index
      %c0_22 = arith.constant 0 : index
      %24 = vector.load %arg6[%c4, %c0_22] : memref<8x128xf32, #tpu.memory_space<vmem>>, vector<1x1xf32>
      %cst_23 = arith.constant dense<0.000000e+00> : vector<8xf32>
      %25 = vector.multi_reduction <add>, %20, %cst_23 [1] : vector<8x128xf32> to vector<8xf32>
      %26 = vector.shape_cast %25 : vector<8xf32> to vector<8x1xf32>
      %27 = arith.mulf %20, %20 : vector<8x128xf32>
      %cst_24 = arith.constant dense<0.000000e+00> : vector<8xf32>
      %28 = vector.multi_reduction <add>, %27, %cst_24 [1] : vector<8x128xf32> to vector<8xf32>
      %29 = vector.shape_cast %28 : vector<8xf32> to vector<8x1xf32>
      %cst_25 = arith.constant 3.125000e-02 : f32
      %30 = vector.broadcast %cst_25 : f32 to vector<8x1xf32>
      %31 = arith.mulf %26, %30 : vector<8x1xf32>
      %cst_26 = arith.constant 3.125000e-02 : f32
      %32 = vector.broadcast %cst_26 : f32 to vector<8x1xf32>
      %33 = arith.mulf %29, %32 : vector<8x1xf32>
      %34 = arith.mulf %31, %31 : vector<8x1xf32>
      %35 = arith.subf %33, %34 : vector<8x1xf32>
      %cst_27 = arith.constant 0.000000e+00 : f32
      %36 = vector.broadcast %cst_27 : f32 to vector<8x1xf32>
      %37 = arith.maximumf %35, %36 : vector<8x1xf32>
      %38 = vector.broadcast %31 : vector<8x1xf32> to vector<8x128xf32>
      %39 = arith.subf %20, %38 : vector<8x128xf32>
      %cst_28 = arith.constant 9.99999974E-6 : f32
      %40 = vector.broadcast %cst_28 : f32 to vector<8x1xf32>
      %41 = arith.addf %37, %40 : vector<8x1xf32>
      %42 = math.rsqrt %41 : vector<8x1xf32>
      %43 = vector.broadcast %42 : vector<8x1xf32> to vector<8x128xf32>
      %44 = arith.mulf %39, %43 : vector<8x128xf32>
      %45 = vector.broadcast %21 : vector<1x128xf32> to vector<8x128xf32>
      %46 = arith.mulf %44, %45 : vector<8x128xf32>
      %47 = vector.broadcast %22 : vector<1x128xf32> to vector<8x128xf32>
      %48 = arith.addf %46, %47 : vector<8x128xf32>
      %49 = arith.truncf %48 : vector<8x128xf32> to vector<8x128xbf16>
      %c0_29 = arith.constant 0 : index
      %c0_30 = arith.constant 0 : index
      %50 = vector.load %arg8[%c0_29, %c0_30] : memref<8x128xbf16, #tpu.memory_space<vmem>>, vector<8x128xbf16>
      tpu.vector_store %arg8[%c0_29, %c0_30], %49 {strides = array<i32>} : memref<8x128xbf16, #tpu.memory_space<vmem>>, vector<8x128xbf16>,
      %51 = vector.broadcast %23 : vector<1x128xf32> to vector<8x128xf32>
      %52 = arith.mulf %48, %51 : vector<8x128xf32>
      %cst_31 = arith.constant dense<0.000000e+00> : vector<8xf32>
      %53 = vector.multi_reduction <add>, %52, %cst_31 [1] : vector<8x128xf32> to vector<8xf32>
      %54 = vector.shape_cast %53 : vector<8xf32> to vector<8x1xf32>
      %55 = vector.broadcast %24 : vector<1x1xf32> to vector<8x1xf32>
      %56 = arith.addf %54, %55 : vector<8x1xf32>
      %57 = arith.negf %56 : vector<8x1xf32>
      %58 = math.exp %57 : vector<8x1xf32>
      %cst_32 = arith.constant 1.000000e+00 : f32
      %59 = vector.broadcast %cst_32 : f32 to vector<8x1xf32>
      %60 = arith.addf %59, %58 : vector<8x1xf32>
      %61 = arith.divf %59, %60 : vector<8x1xf32>
      %c0_33 = arith.constant 0 : index
      %c0_34 = arith.constant 0 : index
      %62 = vector.load %arg9[%c0_33, %c0_34] : memref<8x1xf32, #tpu.memory_space<vmem>>, vector<8x1xf32>
      tpu.vector_store %arg9[%c0_33, %c0_34], %61 {strides = array<i32>} : memref<8x1xf32, #tpu.memory_space<vmem>>, vector<8x1xf32>,
      %cst_35 = arith.constant 0.000000e+00 : f32
      %63 = vector.broadcast %cst_35 : f32 to vector<8x128xf32>
      %c0_36 = arith.constant 0 : index
      %c0_37 = arith.constant 0 : index
      %64 = vector.load %arg10[%c0_36, %c0_37] : memref<8x128xf32, #tpu.memory_space<vmem>>, vector<8x128xf32>
      tpu.vector_store %arg10[%c0_36, %c0_37], %63 {strides = array<i32>} : memref<8x128xf32, #tpu.memory_space<vmem>>, vector<8x128xf32>,
    } else {
    }
    %c0 = arith.constant 0 : index
    %c0_1 = arith.constant 0 : index
    %3 = vector.load %arg8[%c0, %c0_1] : memref<8x128xbf16, #tpu.memory_space<vmem>>, vector<8x128xbf16>
    %c0_2 = arith.constant 0 : index
    %c0_3 = arith.constant 0 : index
    %4 = vector.load %arg3[%c0_2, %c0_3] : memref<128x128xbf16, #tpu.memory_space<vmem>>, vector<128x128xbf16>
    %cst = arith.constant dense<0.000000e+00> : vector<8x128xf32>
    %5 = tpu.matmul %3, %4, %cst {dimension_numbers = #tpu.dot_dimension_numbers<[1], [0], [0], [1], [0, 0, 1, 1], [], []>} : vector<8x128xbf16>, vector<128x128xbf16>, vector<8x128xf32> -> vector<8x128xf32>
    %c0_4 = arith.constant 0 : index
    %c0_5 = arith.constant 0 : index
    %6 = vector.load %arg4[%c0_4, %c0_5] : memref<1x128xf32, #tpu.memory_space<vmem>>, vector<1x128xf32>
    %7 = vector.broadcast %6 : vector<1x128xf32> to vector<8x128xf32>
    %8 = arith.addf %5, %7 : vector<8x128xf32>
    %cst_6 = arith.constant 0.000000e+00 : f32
    %9 = vector.broadcast %cst_6 : f32 to vector<8x128xf32>
    %10 = arith.maximumf %8, %9 : vector<8x128xf32>
    %11 = arith.truncf %10 : vector<8x128xf32> to vector<8x128xbf16>
    %c0_7 = arith.constant 0 : index
    %c0_8 = arith.constant 0 : index
    %12 = vector.load %arg10[%c0_7, %c0_8] : memref<8x128xf32, #tpu.memory_space<vmem>>, vector<8x128xf32>
    %c0_9 = arith.constant 0 : index
    %c0_10 = arith.constant 0 : index
    %13 = vector.load %arg5[%c0_9, %c0_10] : memref<128x128xbf16, #tpu.memory_space<vmem>>, vector<128x128xbf16>
    %cst_11 = arith.constant dense<0.000000e+00> : vector<8x128xf32>
    %14 = tpu.matmul %11, %13, %cst_11 {dimension_numbers = #tpu.dot_dimension_numbers<[1], [0], [0], [1], [0, 0, 1, 1], [], []>} : vector<8x128xbf16>, vector<128x128xbf16>, vector<8x128xf32> -> vector<8x128xf32>
    %15 = arith.addf %12, %14 : vector<8x128xf32>
    %c0_12 = arith.constant 0 : index
    %c0_13 = arith.constant 0 : index
    %16 = vector.load %arg10[%c0_12, %c0_13] : memref<8x128xf32, #tpu.memory_space<vmem>>, vector<8x128xf32>
    tpu.vector_store %arg10[%c0_12, %c0_13], %15 {strides = array<i32>} : memref<8x128xf32, #tpu.memory_space<vmem>>, vector<8x128xf32>,
    %c0_i32_14 = arith.constant 0 : i32
    %17 = arith.cmpi eq, %arg1, %c0_i32_14 : i32
    %18 = arith.extui %17 : i1 to i32
    %c0_i32_15 = arith.constant 0 : i32
    %19 = arith.cmpi ne, %18, %c0_i32_15 : i32
    scf.if %19 {
      %c3 = arith.constant 3 : index
      %c0_16 = arith.constant 0 : index
      %20 = vector.load %arg6[%c3, %c0_16] : memref<8x128xf32, #tpu.memory_space<vmem>>, vector<1x128xf32>
      %c0_17 = arith.constant 0 : index
      %c0_18 = arith.constant 0 : index
      %21 = vector.load %arg2[%c0_17, %c0_18] : memref<8x128xf32, #tpu.memory_space<vmem>>, vector<8x128xf32>
      %c0_19 = arith.constant 0 : index
      %c0_20 = arith.constant 0 : index
      %22 = vector.load %arg10[%c0_19, %c0_20] : memref<8x128xf32, #tpu.memory_space<vmem>>, vector<8x128xf32>
      %23 = vector.broadcast %20 : vector<1x128xf32> to vector<8x128xf32>
      %24 = arith.addf %22, %23 : vector<8x128xf32>
      %c0_21 = arith.constant 0 : index
      %c0_22 = arith.constant 0 : index
      %25 = vector.load %arg9[%c0_21, %c0_22] : memref<8x1xf32, #tpu.memory_space<vmem>>, vector<8x1xf32>
      %26 = vector.broadcast %25 : vector<8x1xf32> to vector<8x128xf32>
      %27 = arith.mulf %26, %24 : vector<8x128xf32>
      %28 = arith.addf %21, %27 : vector<8x128xf32>
      %c0_23 = arith.constant 0 : index
      %c0_24 = arith.constant 0 : index
      %29 = vector.load %arg7[%c0_23, %c0_24] : memref<8x128xf32, #tpu.memory_space<vmem>>, vector<8x128xf32>
      tpu.vector_store %arg7[%c0_23, %c0_24], %28 {strides = array<i32>} : memref<8x128xf32, #tpu.memory_space<vmem>>, vector<8x128xf32>,
    } else {
    }
    return
  }
  func.func @transform_0(%arg0: i32, %arg1: i32) -> (i32, i32) {
    %c0_i32 = arith.constant 0 : i32
    %c0_i32_0 = arith.constant 0 : i32
    return %arg0, %c0_i32 : i32, i32
  }
  func.func @transform_1(%arg0: i32, %arg1: i32) -> (i32, i32) {
    %c0_i32 = arith.constant 0 : i32
    %c0_i32_0 = arith.constant 0 : i32
    return %c0_i32, %arg1 : i32, i32
  }
  func.func @transform_2(%arg0: i32, %arg1: i32) -> (i32, i32) {
    %c0_i32 = arith.constant 0 : i32
    %c0_i32_0 = arith.constant 0 : i32
    return %c0_i32, %arg1 : i32, i32
  }
  func.func @transform_3(%arg0: i32, %arg1: i32) -> (i32, i32) {
    %c0_i32 = arith.constant 0 : i32
    %c0_i32_0 = arith.constant 0 : i32
    return %arg1, %c0_i32 : i32, i32
  }
  func.func @transform_4(%arg0: i32, %arg1: i32) -> (i32, i32) {
    %c0_i32 = arith.constant 0 : i32
    %c0_i32_0 = arith.constant 0 : i32
    %c0_i32_1 = arith.constant 0 : i32
    return %c0_i32, %c0_i32_0 : i32, i32
  }
  func.func @transform_5(%arg0: i32, %arg1: i32) -> (i32, i32) {
    %c0_i32 = arith.constant 0 : i32
    %c0_i32_0 = arith.constant 0 : i32
    return %arg0, %c0_i32 : i32, i32
  }
}

</mosaic_0001>

<llo_original>
// kernel: tpu_custom_call.1
$region0: #{tpu_custom_call.1}
  #allocation0 [shape = 'u32[]', space=smem, size = 0x4, offset = 0x4, fixed_abs, tag = 'smem constant byte address 0x4 - core index']
  #allocation1 [shape = 'u32[144,128]{1,0:T(1,128)}', space=vmem, size = 0x12000, scoped, tag = 'internal scratch']
  #allocation2 [shape = 'bf16[8,128]{1,0:T(8,128)(2,1)}', space=vmem, size = 0x800, scoped, tag = 'scratch operand']
  #allocation3 [shape = 'f32[8,1]{1,0:T(8,128)}', space=vmem, size = 0x1000, scoped, tag = 'scratch operand']
  #allocation4 [shape = 'f32[8,128]{1,0:T(8,128)}', space=vmem, size = 0x1000, scoped, tag = 'scratch operand']
  %s0 = inlined_call_operand.hbm [shape: f32[16,128], index: 0, kind: input, shape index: {}]
  %s1 = inlined_call_operand.hbm [shape: bf16[128,128], index: 1, kind: input, shape index: {}]
  %s2 = inlined_call_operand.vmem [shape: f32[1,128], index: 2, kind: input, shape index: {}]
  %s3 = inlined_call_operand.hbm [shape: bf16[128,128], index: 3, kind: input, shape index: {}]
  %s4 = inlined_call_operand.vmem [shape: f32[8,128], index: 4, kind: input, shape index: {}]
  %s5 = inlined_call_operand.hbm [shape: f32[16,128], index: 5, kind: output, shape index: {}]
  %s6 = sld [smem:[#allocation0]]
  $region73: #{tpu_custom_call.1} parent=0
    _
  %s8 = ssub.s32 1, %s6
  %s9 = scalar_select 0, %s8, %s6
  $region1: #{tpu_custom_call.1} parent=0
    #allocation5 [shape = 'u8[8192]{0}', space=vmem, size = 0x2000, scoped, tag = 'input window, operand 0']
    #allocation6 [shape = 's32[2]{0}', space=sflag, size = 0x8, scoped, tag = 'scoped memory for tpu_custom_call.1']
    #allocation7 [shape = 's32[2]{0}', space=sflag, size = 0x8, scoped, tag = 'scoped memory for tpu_custom_call.1']
    #allocation8 [shape = 'u8[32768]{0}', space=vmem, size = 0x8000, scoped, tag = 'input window, operand 1, single buffered']
    #allocation9 [shape = 's32[1]{0}', space=sflag, size = 0x4, scoped, tag = 'scoped memory for tpu_custom_call.1']
    #allocation10 [shape = 'u8[32768]{0}', space=vmem, size = 0x8000, scoped, tag = 'input window, operand 3, single buffered']
    #allocation11 [shape = 'u8[8192]{0}', space=vmem, size = 0x2000, scoped, tag = 'output window, operand 0']
    %10 = vsyncpa [#allocation6], 0
    %s11 = scalar_lea.sflag [#allocation6], 1
    %12 = vsyncpa %s11, 0
    %13 = vsyncpa [#allocation9], 0
    %14 = vsyncpa [#allocation7], 0
    %s15 = scalar_lea.sflag [#allocation7], 1
    %16 = vsyncpa %s15, 0
    loop: start=0, step=1, limit=4
    $region2: #{tpu_custom_call.1} parent=1 // loop_pre_header
      _
    $region3: #{tpu_custom_call.1} parent=1 // loop_header
      %s18 = sphi 0, %s22
      %p19 = scmp.ge.s32.totalorder %s18, 4
      %s25 = sphi 0, %s37
      %s26 = sphi 0, %s33
      %s27 = sphi 0, %s25
      %s28 = sphi 0, %s26
      %s29 = sphi 0, %s27
      %s30 = sphi 0, %s28
      %s40 = sphi 0, %s42
      %s43 = sphi 0, %s40
      %s44 = sphi 0, %s43
      %s60 = sphi 0, %s44
      %s66 = sphi 0, %s68
      %s69 = sphi 0, %s66
      %s70 = sphi 0, %s69
      %s86 = sphi 0, %s70
      %s92 = sphi 0, %s94
      %s95 = sphi 0, %s92
      %s96 = sphi 0, %s95
      %s112 = sphi 0, %s96
      %s118 = sphi 0, %s120
      %s121 = sphi 0, %s118
      %s122 = sphi 0, %s121
      %s138 = sphi 0, %s122
      %s142 = sphi 0, %s142
      %s144 = sphi 0, %s142
      %s145 = sphi 0, %s144
      %s159 = sphi 0, %s145
      %s165 = sphi 0, %s167
      %s168 = sphi 0, %s165
      %s169 = sphi 0, %s168
      %s185 = sphi 0, %s169
    $region4: #{tpu_custom_call.1} parent=1 // loop_header_branch
      %21 = sbr.rel (%p19) target = $region8
    $region5: #{tpu_custom_call.1} parent=1 // loop_body
      %s23 = ssub.s32 %s18, 1
      %s24 = ssub.s32 %s18, 2
      %s31 = sadd.s32 1, %s26
      %p32 = scmp.ge.s32.totalorder %s31, 1
      %s33 = scalar_select %p32, 0, %s31
      %s34 = sadd.s32 1, %s25
      %s35 = scalar_select %p32, %s34, %s25
      %p36 = scmp.ge.s32.totalorder %s35, 2
      %s37 = scalar_select %p36, 0, %s35
      %s38 = ssub.s32 %s25, %s37
      %p39 = scmp.eq.s32.totalorder %s38, 0
      %s41 = sadd.s32 %s40, 1
      %s42 = scalar_select %p39, %s40, %s41
      %p45 = pneg %p39
      %p46 = scmp.eq.s32.totalorder %s18, 1
      %p47 = por %p45, %p46
      %p48 = scmp.ne.s32.totalorder %s40, %s43
      %p49 = scmp.eq.s32.totalorder %s18, 0
      %p50 = por %p48, %p49
      %p51 = scmp.ne.s32.totalorder %s40, %s43
      %p52 = scmp.eq.s32.totalorder %s23, 1
      %p53 = por %p51, %p52
      %p54 = scmp.ne.s32.totalorder %s43, %s44
      %p55 = scmp.eq.s32.totalorder %s23, 0
      %p56 = por %p54, %p55
      %p57 = scmp.ne.s32.totalorder %s43, %s44
      %p58 = scmp.eq.s32.totalorder %s24, 1
      %p59 = por %p57, %p58
      %p61 = scmp.ne.s32.totalorder %s44, %s60
      %p62 = scmp.eq.s32.totalorder %s24, 0
      %p63 = por %p61, %p62
      %s64 = ssub.s32 %s26, %s33
      %p65 = scmp.eq.s32.totalorder %s64, 0
      %s67 = sadd.s32 %s66, 1
      %s68 = scalar_select %p65, %s66, %s67
      %p71 = pneg %p65
      %p72 = scmp.eq.s32.totalorder %s18, 1
      %p73 = por %p71, %p72
      %p74 = scmp.ne.s32.totalorder %s66, %s69
      %p75 = scmp.eq.s32.totalorder %s18, 0
      %p76 = por %p74, %p75
      %p77 = scmp.ne.s32.totalorder %s66, %s69
      %p78 = scmp.eq.s32.totalorder %s23, 1
      %p79 = por %p77, %p78
      %p80 = scmp.ne.s32.totalorder %s69, %s70
      %p81 = scmp.eq.s32.totalorder %s23, 0
      %p82 = por %p80, %p81
      %p83 = scmp.ne.s32.totalorder %s69, %s70
      %p84 = scmp.eq.s32.totalorder %s24, 1
      %p85 = por %p83, %p84
      %p87 = scmp.ne.s32.totalorder %s70, %s86
      %p88 = scmp.eq.s32.totalorder %s24, 0
      %p89 = por %p87, %p88
      %s90 = ssub.s32 %s26, %s33
      %p91 = scmp.eq.s32.totalorder %s90, 0
      %s93 = sadd.s32 %s92, 1
      %s94 = scalar_select %p91, %s92, %s93
      %p97 = pneg %p91
      %p98 = scmp.eq.s32.totalorder %s18, 1
      %p99 = por %p97, %p98
      %p100 = scmp.ne.s32.totalorder %s92, %s95
      %p101 = scmp.eq.s32.totalorder %s18, 0
      %p102 = por %p100, %p101
      %p103 = scmp.ne.s32.totalorder %s92, %s95
      %p104 = scmp.eq.s32.totalorder %s23, 1
      %p105 = por %p103, %p104
      %p106 = scmp.ne.s32.totalorder %s95, %s96
      %p107 = scmp.eq.s32.totalorder %s23, 0
      %p108 = por %p106, %p107
      %p109 = scmp.ne.s32.totalorder %s95, %s96
      %p110 = scmp.eq.s32.totalorder %s24, 1
      %p111 = por %p109, %p110
      %p113 = scmp.ne.s32.totalorder %s96, %s112
      %p114 = scmp.eq.s32.totalorder %s24, 0
      %p115 = por %p113, %p114
      %s116 = ssub.s32 %s26, %s33
      %p117 = scmp.eq.s32.totalorder %s116, 0
      %s119 = sadd.s32 %s118, 1
      %s120 = scalar_select %p117, %s118, %s119
      %p123 = pneg %p117
      %p124 = scmp.eq.s32.totalorder %s18, 1
      %p125 = por %p123, %p124
      %p126 = scmp.ne.s32.totalorder %s118, %s121
      %p127 = scmp.eq.s32.totalorder %s18, 0
      %p128 = por %p126, %p127
      %p129 = scmp.ne.s32.totalorder %s118, %s121
      %p130 = scmp.eq.s32.totalorder %s23, 1
      %p131 = por %p129, %p130
      %p132 = scmp.ne.s32.totalorder %s121, %s122
      %p133 = scmp.eq.s32.totalorder %s23, 0
      %p134 = por %p132, %p133
      %p135 = scmp.ne.s32.totalorder %s121, %s122
      %p136 = scmp.eq.s32.totalorder %s24, 1
      %p137 = por %p135, %p136
      %p139 = scmp.ne.s32.totalorder %s122, %s138
      %p140 = scmp.eq.s32.totalorder %s24, 0
      %p141 = por %p139, %p140
      %s143 = sadd.s32 %s142, 1
      %p146 = scmp.eq.s32.totalorder %s18, 1
      %p147 = scmp.ne.s32.totalorder %s142, %s144
      %p148 = scmp.eq.s32.totalorder %s18, 0
      %p149 = por %p147, %p148
      %p150 = scmp.ne.s32.totalorder %s142, %s144
      %p151 = scmp.eq.s32.totalorder %s23, 1
      %p152 = por %p150, %p151
      %p153 = scmp.ne.s32.totalorder %s144, %s145
      %p154 = scmp.eq.s32.totalorder %s23, 0
      %p155 = por %p153, %p154
      %p156 = scmp.ne.s32.totalorder %s144, %s145
      %p157 = scmp.eq.s32.totalorder %s24, 1
      %p158 = por %p156, %p157
      %p160 = scmp.ne.s32.totalorder %s145, %s159
      %p161 = scmp.eq.s32.totalorder %s24, 0
      %p162 = por %p160, %p161
      %s163 = ssub.s32 %s25, %s37
      %p164 = scmp.eq.s32.totalorder %s163, 0
      %s166 = sadd.s32 %s165, 1
      %s167 = scalar_select %p164, %s165, %s166
      %p170 = pneg %p164
      %p171 = scmp.eq.s32.totalorder %s18, 1
      %p172 = por %p170, %p171
      %p173 = scmp.ne.s32.totalorder %s165, %s168
      %p174 = scmp.eq.s32.totalorder %s18, 0
      %p175 = por %p173, %p174
      %p176 = scmp.ne.s32.totalorder %s165, %s168
      %p177 = scmp.eq.s32.totalorder %s23, 1
      %p178 = por %p176, %p177
      %p179 = scmp.ne.s32.totalorder %s168, %s169
      %p180 = scmp.eq.s32.totalorder %s23, 0
      %p181 = por %p179, %p180
      %p182 = scmp.ne.s32.totalorder %s168, %s169
      %p183 = scmp.eq.s32.totalorder %s24, 1
      %p184 = por %p182, %p183
      %p186 = scmp.ne.s32.totalorder %s169, %s185
      %p187 = scmp.eq.s32.totalorder %s24, 0
      %p188 = por %p186, %p187
      %p189 = scmp.le.s32.totalorder 1, %s18
      %p190 = scmp.lt.s32.totalorder %s18, 3
      %p191 = pnand %p189, %p190
      %p192 = pneg %p191
      // Predicated region
      $region9: #{tpu_custom_call.1} parent=5 // pred_check
        _
      $region10: #{tpu_custom_call.1} parent=5 // pred_check_branch
        %194 = sbr.rel (%p191) target = $region12
      $region11: #{tpu_custom_call.1} parent=5 // pred_region
        %s195 = ssub.s32 %s18, 1
        // Predicated region
        $region13: #{tpu_custom_call.1} parent=11 // pred_check
          %p196 = pneg %p82
        $region14: #{tpu_custom_call.1} parent=11 // pred_check_branch
          %198 = sbr.rel (%p196) target = $region16
        $region15: #{tpu_custom_call.1} parent=11 // pred_region
          %s200 = ssub.s32 1024, 1024
          %201 = vsyncadd [#allocation9], %s200
          %s202 = smul.addr %s28, 64
          %s203 = scalar_lea.hbm %s1, %s202
          %s204 = sshll.u32 [#allocation8], 4
          %s205 = int_to_ptr.vmem [resolvable:$true] %s204
          %210 = dma.hbm_to_vmem [thread:$0]  %s203, 1024, %s205, [#allocation9], 64, 64, 4
        $region16: #{tpu_custom_call.1} parent=11 // pred_fallthru
          _
        // Predicated region
        $region17: #{tpu_custom_call.1} parent=11 // pred_check
          %p211 = pneg %p108
        $region18: #{tpu_custom_call.1} parent=11 // pred_check_branch
          %213 = sbr.rel (%p211) target = $region20
        $region19: #{tpu_custom_call.1} parent=11 // pred_region
          %p214 = scmp.lt.s32.totalorder %s28, 0
          %s215 = scalar_select %p214, %s28, 0
          %s216 = scalar_lea.vmem %s2, %s215
        $region20: #{tpu_custom_call.1} parent=11 // pred_fallthru
          _
        // Predicated region
        $region21: #{tpu_custom_call.1} parent=11 // pred_check
          %p217 = pneg %p134
        $region22: #{tpu_custom_call.1} parent=11 // pred_check_branch
          %219 = sbr.rel (%p217) target = $region24
        $region23: #{tpu_custom_call.1} parent=11 // pred_region
          %s220 = smul.u32 16, %s28
          %s222 = ssub.s32 1024, 1024
          %223 = vsyncadd [#allocation9], %s222
          %s224 = smul.addr %s220, 64
          %s225 = scalar_lea.hbm %s3, %s224
          %s226 = sshll.u32 [#allocation10], 4
          %s227 = int_to_ptr.vmem [resolvable:$true] %s226
          %232 = dma.hbm_to_vmem [thread:$0]  %s225, 1024, %s227, [#allocation9], 64, 64, 4
        $region24: #{tpu_custom_call.1} parent=11 // pred_fallthru
          _
        // Predicated region
        $region25: #{tpu_custom_call.1} parent=11 // pred_check
          %p233 = pneg %p155
        $region26: #{tpu_custom_call.1} parent=11 // pred_check_branch
          %235 = sbr.rel (%p233) target = $region28
        $region27: #{tpu_custom_call.1} parent=11 // pred_region
          _
        $region28: #{tpu_custom_call.1} parent=11 // pred_fallthru
          _
      $region12: #{tpu_custom_call.1} parent=5 // pred_fallthru
        _
      %p236 = scmp.lt.s32.totalorder %s18, 2
      // Predicated region
      $region29: #{tpu_custom_call.1} parent=5 // pred_check
        %p237 = pneg %p236
      $region30: #{tpu_custom_call.1} parent=5 // pred_check_branch
        %239 = sbr.rel (%p237) target = $region32
      $region31: #{tpu_custom_call.1} parent=5 // pred_region
        // Predicated region
        $region33: #{tpu_custom_call.1} parent=31 // pred_check
          %p240 = pneg %p50
        $region34: #{tpu_custom_call.1} parent=31 // pred_check_branch
          %242 = sbr.rel (%p240) target = $region36
        $region35: #{tpu_custom_call.1} parent=31 // pred_region
          %s243 = sand.u32 %s40, 1
          %s244 = scalar_lea.sflag [#allocation6], %s243
          %s245 = sand.u32 %s40, 1
          %s246 = smul.addr %s245, 8
          %s247 = scalar_lea.vmem [#allocation5], %s246
          %s249 = ssub.s32 128, 128
          %250 = vsyncadd %s244, %s249
          %s251 = smul.addr %s25, 128
          %s252 = scalar_lea.hbm %s0, %s251
          %s254 = sshll.u32 %s247, 4
          %s255 = int_to_ptr.vmem [resolvable:$true] %s254
          %257 = dma.hbm_to_vmem [thread:$0]  %s252, 128, %s255, %s244
        $region36: #{tpu_custom_call.1} parent=31 // pred_fallthru
          _
      $region32: #{tpu_custom_call.1} parent=5 // pred_fallthru
        _
      %p258 = scmp.le.s32.totalorder 1, %s18
      %p259 = scmp.lt.s32.totalorder %s18, 3
      %p260 = pnand %p258, %p259
      %p261 = pneg %p260
      // Predicated region
      $region37: #{tpu_custom_call.1} parent=5 // pred_check
        _
      $region38: #{tpu_custom_call.1} parent=5 // pred_check_branch
        %263 = sbr.rel (%p260) target = $region40
      $region39: #{tpu_custom_call.1} parent=5 // pred_region
        %s264 = ssub.s32 %s18, 1
        %s265 = sand.u32 %s43, 1
        %s266 = scalar_lea.sflag [#allocation6], %s265
        %s267 = sand.u32 %s43, 1
        %s268 = smul.addr %s267, 8
        %s269 = scalar_lea.vmem [#allocation5], %s268
        // Predicated region
        $region41: #{tpu_custom_call.1} parent=39 // pred_check
          %p270 = pneg %p56
        $region42: #{tpu_custom_call.1} parent=39 // pred_check_branch
          %272 = sbr.rel (%p270) target = $region44
        $region43: #{tpu_custom_call.1} parent=39 // pred_region
          %273 = dma.done %s266, 128
        $region44: #{tpu_custom_call.1} parent=39 // pred_fallthru
          _
        // Predicated region
        $region45: #{tpu_custom_call.1} parent=39 // pred_check
          %p274 = pneg %p82
        $region46: #{tpu_custom_call.1} parent=39 // pred_check_branch
          %276 = sbr.rel (%p274) target = $region48
        $region47: #{tpu_custom_call.1} parent=39 // pred_region
          %277 = dma.done [#allocation9], 1024
        $region48: #{tpu_custom_call.1} parent=39 // pred_fallthru
          _
        // Predicated region
        $region49: #{tpu_custom_call.1} parent=39 // pred_check
          %p278 = pneg %p134
        $region50: #{tpu_custom_call.1} parent=39 // pred_check_branch
          %280 = sbr.rel (%p278) target = $region52
        $region51: #{tpu_custom_call.1} parent=39 // pred_region
          %281 = dma.done [#allocation9], 1024
        $region52: #{tpu_custom_call.1} parent=39 // pred_fallthru
          _
        %s282 = sand.u32 %s43, 1
        %s283 = scalar_lea.sflag [#allocation6], %s282
        %s284 = sand.u32 %s43, 1
        %s285 = smul.addr %s284, 8
        %s286 = scalar_lea.vmem [#allocation5], %s285
        %p287 = pneg %p56
        %p288 = pneg %p53
        %p289 = pneg %p82
        %p290 = pneg %p79
        %p291 = scmp.lt.s32.totalorder %s28, 0
        %s292 = scalar_select %p291, %s28, 0
        %s293 = scalar_lea.vmem %s2, %s292
        %p294 = pneg %p108
        %p295 = pneg %p105
        %p296 = pneg %p134
        %p297 = pneg %p131
        %p298 = pneg %p155
        %p299 = pneg %p152
        %p300 = pneg %p181
        %p301 = pneg %p178
        %s302 = sand.u32 %s168, 1
        %s303 = scalar_lea.sflag [#allocation7], %s302
        %s304 = sand.u32 %s168, 1
        %s305 = smul.addr %s304, 8
        %s306 = scalar_lea.vmem [#allocation11], %s305
        %p307 = scmp.lt.s32.totalorder %s28, 0
        %s308 = scalar_select %p307, %s28, 0
        %s309 = scalar_lea.vmem %s2, %s308
        %s310 = smul.u32 16, %s28
        %p312 = scmp.eq.s32.totalorder %s28, 0
        // Predicated region
        $region53: #{tpu_custom_call.1} parent=39 // pred_check
          %p313 = pneg %p312
        $region54: #{tpu_custom_call.1} parent=39 // pred_check_branch
          %315 = sbr.rel (%p313) target = $region56
        $region55: #{tpu_custom_call.1} parent=39 // pred_region
          %v316 = vld [vmem:[%s269] sm:$0xff]
          %v317 = vld [vmem:[%s4] sm:$0x1]
          %v318 = vld [vmem:[%s4 + $0x1] sm:$0x1]
          %v319 = vld [vmem:[%s4 + $0x2] sm:$0x1]
          %v320 = vld [vmem:[%s4 + $0x4] sm:$0x1]
          %321 = vadd.xlane.f32.xlu0 %v316
          %v322 = vpop.xlane.xlu0 %321
          %v323 = vmul.f32 %v316, %v316
          %324 = vadd.xlane.f32.xlu0 %v323
          %v325 = vpop.xlane.xlu0 %324
          %v326 = vmul.f32 %v322, 0.03125
          %v327 = vmul.f32 %v325, 0.03125
          %v328 = vmul.f32 %v326, %v326
          %v329 = vsub.f32 %v327, %v328
          %v330 = vmax.f32 %v329, 0.0
          %v331 = vsub.f32 %v316, %v326
          %v332 = vadd.f32 %v330, 1e-05
          %v333 = vrsqrt.pop %v332
          %v334 = vmul.f32 %v331, %v333
          %v335 = vlaneseq
          %v336 = vshrl.u32 %v335, 7
          %v337 = vsub.s32 0, %v336
          %v338 = vrot.slane %v317, %v337
          %v339 = vmul.f32 %v334, %v338
          %v340 = vlaneseq
          %v341 = vshrl.u32 %v340, 7
          %v342 = vsub.s32 0, %v341
          %v343 = vrot.slane %v318, %v342
          %v344 = vadd.f32 %v339, %v343
          %v345 = vpack.c.bf16 %v344, %v344
          %346 = vst [vmem:[#allocation2] sm:$0xf] %v345
          %v347 = vlaneseq
          %v348 = vshrl.u32 %v347, 7
          %v349 = vsub.s32 0, %v348
          %v350 = vrot.slane %v319, %v349
          %v351 = vmul.f32 %v344, %v350
          %352 = vadd.xlane.f32.xlu0 %v351
          %v353 = vpop.xlane.xlu0 %352
          %v354 = vlaneseq
          %v355 = vshrl.u32 %v354, 7
          %v356 = vsub.s32 0, %v355
          %v357 = vrot.slane %v320, %v356
          %v358 = vadd.f32 %v353, %v357
          %v359 = vxor.u32 %v358, 2147483648
          %v360 = vmul.f32 %v359, 1.442695
          %v361 = vpow.pop %v360
          %v362 = vadd.f32 %v361, 1.0
          %v363 = vrcp.pop %v362
          %v364 = vmul.f32 1.0, %v363
          %vm365 = vcmask 7168
          %366 = vst.msk [vmem:[#allocation3] sm:$0xff] %vm365, %v364
          %367 = vst [vmem:[#allocation4] sm:$0xff] 0.0
        $region56: #{tpu_custom_call.1} parent=39 // pred_fallthru
          _
        %v368 = vld [vmem:[#allocation2] sm:$0xf]
        %v369 = vld [vmem:[#allocation8] sm:$0xf]
        %v370 = vld [vmem:[#allocation8 + $0x4] sm:$0xf]
        %v371 = vld [vmem:[#allocation8 + $0x8] sm:$0xf]
        %v372 = vld [vmem:[#allocation8 + $0xc] sm:$0xf]
        %v373 = vld [vmem:[#allocation8 + $0x10] sm:$0xf]
        %v374 = vld [vmem:[#allocation8 + $0x14] sm:$0xf]
        %v375 = vld [vmem:[#allocation8 + $0x18] sm:$0xf]
        %v376 = vld [vmem:[#allocation8 + $0x1c] sm:$0xf]
        %v377 = vld [vmem:[#allocation8 + $0x20] sm:$0xf]
        %v378 = vld [vmem:[#allocation8 + $0x24] sm:$0xf]
        %v379 = vld [vmem:[#allocation8 + $0x28] sm:$0xf]
        %v380 = vld [vmem:[#allocation8 + $0x2c] sm:$0xf]
        %v381 = vld [vmem:[#allocation8 + $0x30] sm:$0xf]
        %v382 = vld [vmem:[#allocation8 + $0x34] sm:$0xf]
        %v383 = vld [vmem:[#allocation8 + $0x38] sm:$0xf]
        %v384 = vld [vmem:[#allocation8 + $0x3c] sm:$0xf]
        %v385 = vld [vmem:[%s309] sm:$0x1]
        %v387 = vlaneseq
        %v388 = vshrl.u32 %v387, 7
        %v389 = vsub.s32 0, %v388
        %v390 = vrot.slane %v385, %v389
        %v408 = vunpack.c.l.b16 %v369
        %v409 = vunpack.c.l.b16 %v370
        %v410 = vunpack.c.l.b16 %v371
        %v411 = vunpack.c.l.b16 %v372
        %v412 = vunpack.c.l.b16 %v373
        %v413 = vunpack.c.l.b16 %v374
        %v414 = vunpack.c.l.b16 %v375
        %v415 = vunpack.c.l.b16 %v376
        %v416 = vunpack.c.l.b16 %v377
        %v417 = vunpack.c.l.b16 %v378
        %v418 = vunpack.c.l.b16 %v379
        %v419 = vunpack.c.l.b16 %v380
        %v420 = vunpack.c.l.b16 %v381
        %v421 = vunpack.c.l.b16 %v382
        %v422 = vunpack.c.l.b16 %v383
        %v423 = vunpack.c.l.b16 %v384
        %v424 = vpack.c.b16 %v409, %v408
        %v425 = vpack.c.b16 %v411, %v410
        %v426 = vpack.c.b16 %v413, %v412
        %v427 = vpack.c.b16 %v415, %v414
        %v428 = vpack.c.b16 %v417, %v416
        %v429 = vpack.c.b16 %v419, %v418
        %v430 = vpack.c.b16 %v421, %v420
        %v431 = vpack.c.b16 %v423, %v422
        %440 = vmatprep.subr.bf16.mxu0 0
        %441 = vmatpush1.bf16.msra.mxu0 %v424
        %442 = vmatprep.subr.bf16.mxu0 0
        %443 = vmatpush1.bf16.msra.mxu0 %v425
        %444 = vmatprep.subr.bf16.mxu0 0
        %445 = vmatpush1.bf16.msra.mxu0 %v426
        %446 = vmatprep.subr.bf16.mxu0 0
        %447 = vmatpush1.bf16.msra.mxu0 %v427
        %448 = vmatprep.subr.bf16.mxu0 0
        %449 = vmatpush1.bf16.msra.mxu0 %v428
        %450 = vmatprep.subr.bf16.mxu0 0
        %451 = vmatpush1.bf16.msra.mxu0 %v429
        %452 = vmatprep.subr.bf16.mxu0 0
        %453 = vmatpush1.bf16.msra.mxu0 %v430
        %454 = vmatprep.subr.bf16.mxu0 0
        %455 = vmatpush1.bf16.msra.mxu0 %v431
        %456 = vmatprep.subr.bf16.mxu0 0
        %457 = vmatpush1.bf16.msra.mxu0 0
        %458 = vmatprep.subr.bf16.mxu0 0
        %459 = vmatpush1.bf16.msra.mxu0 0
        %460 = vmatprep.subr.bf16.mxu0 0
        %461 = vmatpush1.bf16.msra.mxu0 0
        %462 = vmatprep.subr.bf16.mxu0 0
        %463 = vmatpush1.bf16.msra.mxu0 0
        %464 = vmatprep.subr.bf16.mxu0 0
        %465 = vmatpush1.bf16.msra.mxu0 0
        %466 = vmatprep.subr.bf16.mxu0 0
        %467 = vmatpush1.bf16.msra.mxu0 0
        %468 = vmatprep.subr.bf16.mxu0 0
        %469 = vmatpush1.bf16.msra.mxu0 0
        %470 = vmatprep.subr.bf16.mxu0 0
        %471 = vmatpush1.bf16.msra.mxu0 0
        %472 = vmatprep.mubr.bf16.mxu0 0
        %473 = vmatmul.mubr.bf16.gmra.mrb[0].mxu0 %v368
        %v474 = vpop.f32.mrb[0].mxu0
        %v475 = vadd.f32 %v390, %v474
        %v476 = vpop.f32.mrb[0].mxu0
        %v477 = vpop.f32.mrb[0].mxu0
        %v478 = vpop.f32.mrb[0].mxu0
        %479 = vdwg.mxu0
        %v480 = vmax.f32 %v475, 0.0
        %v481 = vpack.c.bf16 %v480, %v480
        %v482 = vld [vmem:[#allocation4] sm:$0xff]
        %v483 = vld [vmem:[#allocation10] sm:$0xf]
        %v484 = vld [vmem:[#allocation10 + $0x4] sm:$0xf]
        %v485 = vld [vmem:[#allocation10 + $0x8] sm:$0xf]
        %v486 = vld [vmem:[#allocation10 + $0xc] sm:$0xf]
        %v487 = vld [vmem:[#allocation10 + $0x10] sm:$0xf]
        %v488 = vld [vmem:[#allocation10 + $0x14] sm:$0xf]
        %v489 = vld [vmem:[#allocation10 + $0x18] sm:$0xf]
        %v490 = vld [vmem:[#allocation10 + $0x1c] sm:$0xf]
        %v491 = vld [vmem:[#allocation10 + $0x20] sm:$0xf]
        %v492 = vld [vmem:[#allocation10 + $0x24] sm:$0xf]
        %v493 = vld [vmem:[#allocation10 + $0x28] sm:$0xf]
        %v494 = vld [vmem:[#allocation10 + $0x2c] sm:$0xf]
        %v495 = vld [vmem:[#allocation10 + $0x30] sm:$0xf]
        %v496 = vld [vmem:[#allocation10 + $0x34] sm:$0xf]
        %v497 = vld [vmem:[#allocation10 + $0x38] sm:$0xf]
        %v498 = vld [vmem:[#allocation10 + $0x3c] sm:$0xf]
        %v515 = vunpack.c.l.b16 %v483
        %v516 = vunpack.c.l.b16 %v484
        %v517 = vunpack.c.l.b16 %v485
        %v518 = vunpack.c.l.b16 %v486
        %v519 = vunpack.c.l.b16 %v487
        %v520 = vunpack.c.l.b16 %v488
        %v521 = vunpack.c.l.b16 %v489
        %v522 = vunpack.c.l.b16 %v490
        %v523 = vunpack.c.l.b16 %v491
        %v524 = vunpack.c.l.b16 %v492
        %v525 = vunpack.c.l.b16 %v493
        %v526 = vunpack.c.l.b16 %v494
        %v527 = vunpack.c.l.b16 %v495
        %v528 = vunpack.c.l.b16 %v496
        %v529 = vunpack.c.l.b16 %v497
        %v530 = vunpack.c.l.b16 %v498
        %v531 = vpack.c.b16 %v516, %v515
        %v532 = vpack.c.b16 %v518, %v517
        %v533 = vpack.c.b16 %v520, %v519
        %v534 = vpack.c.b16 %v522, %v521
        %v535 = vpack.c.b16 %v524, %v523
        %v536 = vpack.c.b16 %v526, %v525
        %v537 = vpack.c.b16 %v528, %v527
        %v538 = vpack.c.b16 %v530, %v529
        %547 = vmatprep.subr.bf16.mxu0 0
        %548 = vmatpush1.bf16.msra.mxu0 %v531
        %549 = vmatprep.subr.bf16.mxu0 0
        %550 = vmatpush1.bf16.msra.mxu0 %v532
        %551 = vmatprep.subr.bf16.mxu0 0
        %552 = vmatpush1.bf16.msra.mxu0 %v533
        %553 = vmatprep.subr.bf16.mxu0 0
        %554 = vmatpush1.bf16.msra.mxu0 %v534
        %555 = vmatprep.subr.bf16.mxu0 0
        %556 = vmatpush1.bf16.msra.mxu0 %v535
        %557 = vmatprep.subr.bf16.mxu0 0
        %558 = vmatpush1.bf16.msra.mxu0 %v536
        %559 = vmatprep.subr.bf16.mxu0 0
        %560 = vmatpush1.bf16.msra.mxu0 %v537
        %561 = vmatprep.subr.bf16.mxu0 0
        %562 = vmatpush1.bf16.msra.mxu0 %v538
        %563 = vmatprep.subr.bf16.mxu0 0
        %564 = vmatpush1.bf16.msra.mxu0 0
        %565 = vmatprep.subr.bf16.mxu0 0
        %566 = vmatpush1.bf16.msra.mxu0 0
        %567 = vmatprep.subr.bf16.mxu0 0
        %568 = vmatpush1.bf16.msra.mxu0 0
        %569 = vmatprep.subr.bf16.mxu0 0
        %570 = vmatpush1.bf16.msra.mxu0 0
        %571 = vmatprep.subr.bf16.mxu0 0
        %572 = vmatpush1.bf16.msra.mxu0 0
        %573 = vmatprep.subr.bf16.mxu0 0
        %574 = vmatpush1.bf16.msra.mxu0 0
        %575 = vmatprep.subr.bf16.mxu0 0
        %576 = vmatpush1.bf16.msra.mxu0 0
        %577 = vmatprep.subr.bf16.mxu0 0
        %578 = vmatpush1.bf16.msra.mxu0 0
        %579 = vmatprep.mubr.bf16.mxu0 0
        %580 = vmatmul.mubr.bf16.gmra.mrb[0].mxu0 %v481
        %v581 = vpop.f32.mrb[0].mxu0
        %v582 = vadd.f32 0.0, %v581
        %v583 = vpop.f32.mrb[0].mxu0
        %v584 = vpop.f32.mrb[0].mxu0
        %v585 = vpop.f32.mrb[0].mxu0
        %586 = vdwg.mxu0
        %v587 = vadd.f32 %v482, %v582
        %588 = vst [vmem:[#allocation4] sm:$0xff] %v587
        // Predicated region
        $region57: #{tpu_custom_call.1} parent=39 // pred_check
          %p589 = pneg %p312
        $region58: #{tpu_custom_call.1} parent=39 // pred_check_branch
          %591 = sbr.rel (%p589) target = $region60
        $region59: #{tpu_custom_call.1} parent=39 // pred_region
          %v592 = vld [vmem:[%s4 + $0x3] sm:$0x1]
          %v593 = vld [vmem:[%s269] sm:$0xff]
          %v594 = vld [vmem:[#allocation4] sm:$0xff]
          %v595 = vlaneseq
          %v596 = vshrl.u32 %v595, 7
          %v597 = vsub.s32 0, %v596
          %v598 = vrot.slane %v592, %v597
          %v599 = vadd.f32 %v594, %v598
          %v600 = vld [vmem:[#allocation3] sm:$0xff]
          %602 = vset.pattern.permute.xlu0 0
          %603 = vperm.xlu0 %602, %v600
          %v604 = vpop.permute.xlu0 %603
          %v606 = vmul.f32 %v604, %v599
          %v607 = vadd.f32 %v593, %v606
          %608 = vst [vmem:[%s306] sm:$0xff] %v607
        $region60: #{tpu_custom_call.1} parent=39 // pred_fallthru
          _
        %s609 = sand.u32 %s168, 1
        %s610 = scalar_lea.sflag [#allocation7], %s609
        %s611 = sand.u32 %s168, 1
        %s612 = smul.addr %s611, 8
        %s613 = scalar_lea.vmem [#allocation11], %s612
        // Predicated region
        $region61: #{tpu_custom_call.1} parent=39 // pred_check
          %p614 = pneg %p178
        $region62: #{tpu_custom_call.1} parent=39 // pred_check_branch
          %616 = sbr.rel (%p614) target = $region64
        $region63: #{tpu_custom_call.1} parent=39 // pred_region
          %s618 = ssub.s32 128, 128
          %619 = vsyncadd %s610, %s618
          %s620 = smul.addr %s27, 128
          %s621 = scalar_lea.hbm %s5, %s620
          %s623 = sshll.u32 %s613, 4
          %s624 = int_to_ptr.vmem [resolvable:$true] %s623
          %626 = dma.vmem_to_hbm [thread:$0]  %s624, 128, %s621, %s610
        $region64: #{tpu_custom_call.1} parent=39 // pred_fallthru
          _
      $region40: #{tpu_custom_call.1} parent=5 // pred_fallthru
        _
      %p627 = scmp.le.s32.totalorder 2, %s18
      // Predicated region
      $region65: #{tpu_custom_call.1} parent=5 // pred_check
        %p628 = pneg %p627
      $region66: #{tpu_custom_call.1} parent=5 // pred_check_branch
        %630 = sbr.rel (%p628) target = $region68
      $region67: #{tpu_custom_call.1} parent=5 // pred_region
        %s631 = ssub.s32 %s18, 2
        // Predicated region
        $region69: #{tpu_custom_call.1} parent=67 // pred_check
          %p632 = pneg %p184
        $region70: #{tpu_custom_call.1} parent=67 // pred_check_branch
          %634 = sbr.rel (%p632) target = $region72
        $region71: #{tpu_custom_call.1} parent=67 // pred_region
          %s635 = sand.u32 %s169, 1
          %s636 = scalar_lea.sflag [#allocation7], %s635
          %s637 = sand.u32 %s169, 1
          %s638 = smul.addr %s637, 8
          %s639 = scalar_lea.vmem [#allocation11], %s638
          %640 = dma.done %s636, 128
        $region72: #{tpu_custom_call.1} parent=67 // pred_fallthru
          _
      $region68: #{tpu_custom_call.1} parent=5 // pred_fallthru
        _
    $region6: #{tpu_custom_call.1} parent=1 // loop_footer
      %s22 = sadd.s32 1, %s18
    $region7: #{tpu_custom_call.1} parent=1 // loop_footer_branch
      %17 = sbr.rel target = $region3
    $region8: #{tpu_custom_call.1} parent=1 // loop_exit
      _
    %641 = vsyncpa [#allocation6], 1
    %s642 = scalar_lea.sflag [#allocation6], 1
    %643 = vsyncpa %s642, 1
    %644 = vsyncpa [#allocation9], 1
    %645 = vsyncpa [#allocation7], 1
    %s646 = scalar_lea.sflag [#allocation7], 1
    %647 = vsyncpa %s646, 1

</llo_original>
